<compile_context>
chip_gen: v7x
topology: tpu7x:2x2x1
jax: 0.10.0
libtpu: 0.0.40
codegen_flags: <defaults>
</compile_context>

<pallas_src>
import math

import jax
import jax.numpy as jnp
from jax.experimental import pallas as pl
from jax.experimental.pallas import tpu as pltpu


def _round_up(n, m):
    return ((n + m - 1) // m) * m


def ffn_lora_kernel(x_ref,
                    wfct_ref, bfc_ref, afct_ref, bfct_ref,
                    wpt_ref, bp_ref, apt_ref, bpt_ref,
                    o_ref,
                    acc_ref, la_ref, lp_ref):
    """Grid = (row tiles, F chunks). Accumulates c_proj over F chunks."""
    j = pl.program_id(1)
    nj = pl.num_programs(1)

    x = x_ref[...]                                            # (TM, D)

    @pl.when(j == 0)
    def _init():
        # LoRA-A projection for c_fc depends only on the row tile: compute once
        # per row tile, keep it resident in VMEM scratch in compute dtype
        # (scale pre-folded into AfcT in the wrapper).
        la_ref[...] = jnp.dot(
            x, afct_ref[...],
            preferred_element_type=jnp.float32).astype(la_ref.dtype)   # (TM, Rp)
        acc_ref[...] = jnp.zeros_like(acc_ref)                          # (TM, D)
        lp_ref[...] = jnp.zeros_like(lp_ref)                            # (TM, Rp)

    # ---- c_fc chunk: h = x @ WfcT[:, j] + bfc[j] + la @ BfcT[:, j] ----
    h = jnp.dot(x, wfct_ref[...], preferred_element_type=jnp.float32)   # (TM, TF)
    h += bfc_ref[...]                                                   # (1, TF)
    h += jnp.dot(la_ref[...], bfct_ref[...],
                 preferred_element_type=jnp.float32)

    # ---- QuickGELU (sigmoid lowers to the EUP slot; free alongside MXU) ----
    g = h * jax.nn.sigmoid(1.702 * h)
    gc = g.astype(wpt_ref.dtype)

    # ---- c_proj: accumulate dense part and LoRA-A part over F chunks ----
    acc_ref[...] += jnp.dot(gc, wpt_ref[...], preferred_element_type=jnp.float32)
    lp_ref[...] += jnp.dot(gc, apt_ref[...], preferred_element_type=jnp.float32)

    @pl.when(j == nj - 1)
    def _finalize():
        out = acc_ref[...] + bp_ref[...]
        out += jnp.dot(lp_ref[...].astype(bpt_ref.dtype), bpt_ref[...],
                       preferred_element_type=jnp.float32)
        o_ref[...] = out.astype(o_ref.dtype)


def multi_lora_ffn(x, params, lora_gate, *, lora_r, lora_alpha,
                   tm=256, tf=512, compute_dtype=jnp.float32):
    """x: (M, D). params: dict of PyTorch-layout weights. lora_gate: python int.

    tm: row tile (tune: 128 on v5e, 256 on v6e/v7x).
    tf: hidden-dim (F) chunk, multiple of 128.
    compute_dtype: jnp.float32 or jnp.bfloat16 (MXU inputs; accumulation stays f32).
    """
    M, D = x.shape
    wfc, bfc = params["wfc"], params["bfc"]           # (F, D), (F,)
    wp, bp = params["wp"], params["bp"]               # (D, F), (D,)
    afc = params["afc_list"][lora_gate]               # (r, D)
    bfc_lora = params["bfc_list"][lora_gate]          # (F, r)
    ap = params["ap_list"][lora_gate]                 # (r, F)
    bp_lora = params["bp_list"][lora_gate]            # (D, r)
    F = wfc.shape[0]
    r = lora_r
    scale = lora_alpha / math.sqrt(lora_r)

    # ---- tile sizes / padding ----
    tm_eff = min(tm, _round_up(M, 8))
    tf_eff = min(tf, _round_up(F, 128))
    M_pad = _round_up(M, tm_eff)
    F_pad = _round_up(F, tf_eff)
    r_pad = _round_up(r, 128)          # lane-dense LoRA rank (zero-padded: no-op)
    out_dtype = x.dtype

    # ---- rows: pad + cast ----
    xp = x if M_pad == M else jnp.pad(x, ((0, M_pad - M), (0, 0)))
    xp = xp.astype(compute_dtype)

    # ---- weights: fold LoRA scale into A, pre-transpose ONCE, pad, cast ----
    wfcT = jnp.pad(wfc.T, ((0, 0), (0, F_pad - F))).astype(compute_dtype)        # (D, Fp)
    bfc2 = jnp.pad(bfc.reshape(1, F), ((0, 0), (0, F_pad - F))).astype(jnp.float32)
    afcT = jnp.pad((afc * scale).T, ((0, 0), (0, r_pad - r))).astype(compute_dtype)     # (D, Rp)
    bfcT = jnp.pad(bfc_lora.T, ((0, r_pad - r), (0, F_pad - F))).astype(compute_dtype)  # (Rp, Fp)
    wpT = jnp.pad(wp.T, ((0, F_pad - F), (0, 0))).astype(compute_dtype)          # (Fp, D)
    bp2 = bp.reshape(1, D).astype(jnp.float32)
    apT = jnp.pad((ap * scale).T, ((0, F_pad - F), (0, r_pad - r))).astype(compute_dtype)  # (Fp, Rp)
    bpT = jnp.pad(bp_lora.T, ((0, r_pad - r), (0, 0))).astype(compute_dtype)     # (Rp, D)

    grid = (M_pad // tm_eff, F_pad // tf_eff)
    const = lambda i, j: (0, 0)

    out = pl.pallas_call(
        ffn_lora_kernel,
        out_shape=jax.ShapeDtypeStruct((M_pad, D), out_dtype),
        grid_spec=pltpu.PrefetchScalarGridSpec(
            num_scalar_prefetch=0,
            grid=grid,
            in_specs=[
                pl.BlockSpec((tm_eff, D), lambda i, j: (i, 0)),      # x rows (resident across j)
                pl.BlockSpec((D, tf_eff), lambda i, j: (0, j)),      # WfcT chunk
                pl.BlockSpec((1, tf_eff), lambda i, j: (0, j)),      # bfc chunk
                pl.BlockSpec((D, r_pad), const),                     # AfcT (scaled)
                pl.BlockSpec((r_pad, tf_eff), lambda i, j: (0, j)),  # BfcT chunk
                pl.BlockSpec((tf_eff, D), lambda i, j: (j, 0)),      # WpT chunk
                pl.BlockSpec((1, D), const),                         # bp
                pl.BlockSpec((tf_eff, r_pad), lambda i, j: (j, 0)),  # ApT chunk (scaled)
                pl.BlockSpec((r_pad, D), const),                     # BpT
            ],
            out_specs=pl.BlockSpec((tm_eff, D), lambda i, j: (i, 0)),
            scratch_shapes=[
                pltpu.VMEM((tm_eff, D), jnp.float32),       # c_proj accumulator
                pltpu.VMEM((tm_eff, r_pad), compute_dtype), # la = x @ AfcT (MXU dtype)
                pltpu.VMEM((tm_eff, r_pad), jnp.float32),   # lp = sum_j g_j @ ApT_j
            ],
        ),
        compiler_params=pltpu.CompilerParams(
            dimension_semantics=("parallel", "arbitrary")),
    )(xp, wfcT, bfc2, afcT, bfcT, wpT, bp2, apT, bpT)

    return out[:M]


def _reference(x, params, lora_gate, *, lora_r, lora_alpha):
    scale = lora_alpha / math.sqrt(lora_r)
    wfc, bfc = params["wfc"], params["bfc"]
    wp, bp = params["wp"], params["bp"]
    afc = params["afc_list"][lora_gate]
    bfc_lora = params["bfc_list"][lora_gate]
    ap = params["ap_list"][lora_gate]
    bp_lora = params["bp_list"][lora_gate]
    h = x @ wfc.T + bfc + (x @ afc.T) @ bfc_lora.T * scale
    g = h * jax.nn.sigmoid(1.702 * h)
    return g @ wp.T + bp + (g @ ap.T) @ bp_lora.T * scale


def _kaiming_uniform(key, shape, a=math.sqrt(5)):
    # nn.init.kaiming_uniform_ with fan_in = shape[1]
    fan_in = shape[1]
    gain = math.sqrt(2.0 / (1.0 + a * a))
    bound = gain * math.sqrt(3.0 / fan_in)
    return jax.random.uniform(key, shape, jnp.float32, -bound, bound)


if __name__ == "__main__":
    # Small shapes: batch=2, seq=8, d_model=32, d_ff=128 (GPT-style 4x), r=4.
    B, S, D, F = 2, 8, 32, 128
    lora_r, lora_alpha, num_loras = 4, 1, 2
    lora_gate = 1

    key = jax.random.PRNGKey(0)
    ks = jax.random.split(key, 12)

    # Frozen Linear params (nn.Linear default init).
    wfc = _kaiming_uniform(ks[0], (F, D))
    bfc = jax.random.uniform(ks[1], (F,), jnp.float32,
                             -1.0 / math.sqrt(D), 1.0 / math.sqrt(D))
    wp = _kaiming_uniform(ks[2], (D, F))
    bp = jax.random.uniform(ks[3], (D,), jnp.float32,
                            -1.0 / math.sqrt(F), 1.0 / math.sqrt(F))

    # LoRA params. The module initializes B to zeros; here we use small nonzero
    # B so the LoRA path is actually exercised numerically (same semantics).
    afc_list = [_kaiming_uniform(ks[4 + i], (lora_r, D)) for i in range(num_loras)]
    ap_list = [_kaiming_uniform(ks[6 + i], (lora_r, F)) for i in range(num_loras)]
    bfc_list = [0.05 * jax.random.normal(ks[8 + i], (F, lora_r), jnp.float32)
                for i in range(num_loras)]
    bp_list = [0.05 * jax.random.normal(ks[10 + i], (D, lora_r), jnp.float32)
               for i in range(num_loras)]

    params = dict(wfc=wfc, bfc=bfc, wp=wp, bp=bp,
                  afc_list=afc_list, bfc_list=bfc_list,
                  ap_list=ap_list, bp_list=bp_list)

    x = jax.random.normal(ks[7], (B, S, D), jnp.float32)
    x2d = x.reshape(B * S, D)   # rows = batch*seq, feature last

    ref = _reference(x2d, params, lora_gate,
                     lora_r=lora_r, lora_alpha=lora_alpha)

    # ---- f32 compute (tight tolerance) ----
    out_f32 = multi_lora_ffn(x2d, params, lora_gate,
                             lora_r=lora_r, lora_alpha=lora_alpha,
                             tm=128, tf=128, compute_dtype=jnp.float32)
    jax.block_until_ready(out_f32)
    assert jnp.allclose(out_f32, ref, atol=1e-4, rtol=1e-4), "f32 mismatch vs reference"

    # ---- bf16 MXU inputs, f32 accumulation (looser tolerance) ----
    out_bf16 = multi_lora_ffn(x2d, params, lora_gate,
                              lora_r=lora_r, lora_alpha=lora_alpha,
                              tm=128, tf=128, compute_dtype=jnp.bfloat16)
    jax.block_until_ready(out_bf16)
    assert jnp.allclose(out_bf16, ref, atol=5e-2, rtol=5e-2), "bf16 mismatch vs reference"

    # TODO(synk): training-mode dropout on the LoRA input is not implemented
    # (forward here matches eval mode, where dropout is inactive).
    print("KERNEL_OK")
</pallas_src>

<mosaic_0001>
module attributes {stable_mosaic.version = 11 : i64} {
  func.func @ffn_lora_kernel(%arg0: i32, %arg1: i32, %arg2: memref<16x32xf32, #tpu.memory_space<vmem>>, %arg3: memref<32x128xf32, #tpu.memory_space<vmem>>, %arg4: memref<1x128xf32, #tpu.memory_space<vmem>>, %arg5: memref<32x128xf32, #tpu.memory_space<vmem>>, %arg6: memref<128x128xf32, #tpu.memory_space<vmem>>, %arg7: memref<128x32xf32, #tpu.memory_space<vmem>>, %arg8: memref<1x32xf32, #tpu.memory_space<vmem>>, %arg9: memref<128x128xf32, #tpu.memory_space<vmem>>, %arg10: memref<128x32xf32, #tpu.memory_space<vmem>>, %arg11: memref<16x32xf32, #tpu.memory_space<vmem>>, %arg12: memref<16x32xf32, #tpu.memory_space<vmem>>, %arg13: memref<16x128xf32, #tpu.memory_space<vmem>>, %arg14: memref<16x128xf32, #tpu.memory_space<vmem>>) attributes {dimension_semantics = [#tpu.dimension_semantics<parallel>, #tpu.dimension_semantics<arbitrary>], iteration_bounds = array<i64: 1, 1>, scalar_prefetch = 0 : i64, scratch_operands = 3 : i64, tpu.core_type = #tpu.core_type<tc>, window_params = [{transform_indices = @transform_0, window_bounds = array<i64: 16, 32>}, {transform_indices = @transform_1, window_bounds = array<i64: 32, 128>}, {transform_indices = @transform_2, window_bounds = array<i64: 1, 128>}, {pipeline_mode = #tpu.pipeline_mode<synchronous>, transform_indices = @transform_3, window_bounds = array<i64: 32, 128>}, {transform_indices = @transform_4, window_bounds = array<i64: 128, 128>}, {transform_indices = @transform_5, window_bounds = array<i64: 128, 32>}, {pipeline_mode = #tpu.pipeline_mode<synchronous>, transform_indices = @transform_6, window_bounds = array<i64: 1, 32>}, {transform_indices = @transform_7, window_bounds = array<i64: 128, 128>}, {pipeline_mode = #tpu.pipeline_mode<synchronous>, transform_indices = @transform_8, window_bounds = array<i64: 128, 32>}, {transform_indices = @transform_9, window_bounds = array<i64: 16, 32>}]} {
    %c0 = arith.constant 0 : index
    %c0_0 = arith.constant 0 : index
    %0 = vector.load %arg2[%c0, %c0_0] : memref<16x32xf32, #tpu.memory_space<vmem>>, vector<16x32xf32>
    %c0_i32 = arith.constant 0 : i32
    %1 = arith.cmpi eq, %arg1, %c0_i32 : i32
    %2 = arith.extui %1 : i1 to i32
    %c0_i32_1 = arith.constant 0 : i32
    %3 = arith.cmpi ne, %2, %c0_i32_1 : i32
    scf.if %3 {
      %c0_29 = arith.constant 0 : index
      %c0_30 = arith.constant 0 : index
      %34 = vector.load %arg5[%c0_29, %c0_30] : memref<32x128xf32, #tpu.memory_space<vmem>>, vector<32x128xf32>
      %cst_31 = arith.constant dense<0.000000e+00> : vector<16x128xf32>
      %35 = tpu.matmul %0, %34, %cst_31 {dimension_numbers = #tpu.dot_dimension_numbers<[1], [0], [0], [1], [0, 0, 1, 1], [], []>} : vector<16x32xf32>, vector<32x128xf32>, vector<16x128xf32> -> vector<16x128xf32>
      %c0_32 = arith.constant 0 : index
      %c0_33 = arith.constant 0 : index
      %36 = vector.load %arg13[%c0_32, %c0_33] : memref<16x128xf32, #tpu.memory_space<vmem>>, vector<16x128xf32>
      tpu.vector_store %arg13[%c0_32, %c0_33], %35 {strides = array<i32>} : memref<16x128xf32, #tpu.memory_space<vmem>>, vector<16x128xf32>,
      %cst_34 = arith.constant 0.000000e+00 : f32
      %37 = vector.broadcast %cst_34 : f32 to vector<16x32xf32>
      %c0_35 = arith.constant 0 : index
      %c0_36 = arith.constant 0 : index
      %38 = vector.load %arg12[%c0_35, %c0_36] : memref<16x32xf32, #tpu.memory_space<vmem>>, vector<16x32xf32>
      tpu.vector_store %arg12[%c0_35, %c0_36], %37 {strides = array<i32>} : memref<16x32xf32, #tpu.memory_space<vmem>>, vector<16x32xf32>,
      %cst_37 = arith.constant 0.000000e+00 : f32
      %39 = vector.broadcast %cst_37 : f32 to vector<16x128xf32>
      %c0_38 = arith.constant 0 : index
      %c0_39 = arith.constant 0 : index
      %40 = vector.load %arg14[%c0_38, %c0_39] : memref<16x128xf32, #tpu.memory_space<vmem>>, vector<16x128xf32>
      tpu.vector_store %arg14[%c0_38, %c0_39], %39 {strides = array<i32>} : memref<16x128xf32, #tpu.memory_space<vmem>>, vector<16x128xf32>,
    } else {
    }
    %c0_2 = arith.constant 0 : index
    %c0_3 = arith.constant 0 : index
    %4 = vector.load %arg3[%c0_2, %c0_3] : memref<32x128xf32, #tpu.memory_space<vmem>>, vector<32x128xf32>
    %cst = arith.constant dense<0.000000e+00> : vector<16x128xf32>
    %5 = tpu.matmul %0, %4, %cst {dimension_numbers = #tpu.dot_dimension_numbers<[1], [0], [0], [1], [0, 0, 1, 1], [], []>} : vector<16x32xf32>, vector<32x128xf32>, vector<16x128xf32> -> vector<16x128xf32>
    %c0_4 = arith.constant 0 : index
    %c0_5 = arith.constant 0 : index
    %6 = vector.load %arg4[%c0_4, %c0_5] : memref<1x128xf32, #tpu.memory_space<vmem>>, vector<1x128xf32>
    %7 = vector.broadcast %6 : vector<1x128xf32> to vector<16x128xf32>
    %8 = arith.addf %5, %7 : vector<16x128xf32>
    %c0_6 = arith.constant 0 : index
    %c0_7 = arith.constant 0 : index
    %9 = vector.load %arg13[%c0_6, %c0_7] : memref<16x128xf32, #tpu.memory_space<vmem>>, vector<16x128xf32>
    %c0_8 = arith.constant 0 : index
    %c0_9 = arith.constant 0 : index
    %10 = vector.load %arg6[%c0_8, %c0_9] : memref<128x128xf32, #tpu.memory_space<vmem>>, vector<128x128xf32>
    %cst_10 = arith.constant dense<0.000000e+00> : vector<16x128xf32>
    %11 = tpu.matmul %9, %10, %cst_10 {dimension_numbers = #tpu.dot_dimension_numbers<[1], [0], [0], [1], [0, 0, 1, 1], [], []>} : vector<16x128xf32>, vector<128x128xf32>, vector<16x128xf32> -> vector<16x128xf32>
    %12 = arith.addf %8, %11 : vector<16x128xf32>
    %cst_11 = arith.constant 1.702000e+00 : f32
    %13 = vector.broadcast %cst_11 : f32 to vector<16x128xf32>
    %14 = arith.mulf %13, %12 : vector<16x128xf32>
    %15 = arith.negf %14 : vector<16x128xf32>
    %16 = math.exp %15 : vector<16x128xf32>
    %cst_12 = arith.constant 1.000000e+00 : f32
    %17 = vector.broadcast %cst_12 : f32 to vector<16x128xf32>
    %18 = arith.addf %17, %16 : vector<16x128xf32>
    %19 = arith.divf %17, %18 : vector<16x128xf32>
    %20 = arith.mulf %12, %19 : vector<16x128xf32>
    %c0_13 = arith.constant 0 : index
    %c0_14 = arith.constant 0 : index
    %21 = vector.load %arg12[%c0_13, %c0_14] : memref<16x32xf32, #tpu.memory_space<vmem>>, vector<16x32xf32>
    %c0_15 = arith.constant 0 : index
    %c0_16 = arith.constant 0 : index
    %22 = vector.load %arg7[%c0_15, %c0_16] : memref<128x32xf32, #tpu.memory_space<vmem>>, vector<128x32xf32>
    %cst_17 = arith.constant dense<0.000000e+00> : vector<16x32xf32>
    %23 = tpu.matmul %20, %22, %cst_17 {dimension_numbers = #tpu.dot_dimension_numbers<[1], [0], [0], [1], [0, 0, 1, 1], [], []>} : vector<16x128xf32>, vector<128x32xf32>, vector<16x32xf32> -> vector<16x32xf32>
    %24 = arith.addf %21, %23 : vector<16x32xf32>
    %c0_18 = arith.constant 0 : index
    %c0_19 = arith.constant 0 : index
    %25 = vector.load %arg12[%c0_18, %c0_19] : memref<16x32xf32, #tpu.memory_space<vmem>>, vector<16x32xf32>
    tpu.vector_store %arg12[%c0_18, %c0_19], %24 {strides = array<i32>} : memref<16x32xf32, #tpu.memory_space<vmem>>, vector<16x32xf32>,
    %c0_20 = arith.constant 0 : index
    %c0_21 = arith.constant 0 : index
    %26 = vector.load %arg14[%c0_20, %c0_21] : memref<16x128xf32, #tpu.memory_space<vmem>>, vector<16x128xf32>
    %c0_22 = arith.constant 0 : index
    %c0_23 = arith.constant 0 : index
    %27 = vector.load %arg9[%c0_22, %c0_23] : memref<128x128xf32, #tpu.memory_space<vmem>>, vector<128x128xf32>
    %cst_24 = arith.constant dense<0.000000e+00> : vector<16x128xf32>
    %28 = tpu.matmul %20, %27, %cst_24 {dimension_numbers = #tpu.dot_dimension_numbers<[1], [0], [0], [1], [0, 0, 1, 1], [], []>} : vector<16x128xf32>, vector<128x128xf32>, vector<16x128xf32> -> vector<16x128xf32>
    %29 = arith.addf %26, %28 : vector<16x128xf32>
    %c0_25 = arith.constant 0 : index
    %c0_26 = arith.constant 0 : index
    %30 = vector.load %arg14[%c0_25, %c0_26] : memref<16x128xf32, #tpu.memory_space<vmem>>, vector<16x128xf32>
    tpu.vector_store %arg14[%c0_25, %c0_26], %29 {strides = array<i32>} : memref<16x128xf32, #tpu.memory_space<vmem>>, vector<16x128xf32>,
    %c0_i32_27 = arith.constant 0 : i32
    %31 = arith.cmpi eq, %arg1, %c0_i32_27 : i32
    %32 = arith.extui %31 : i1 to i32
    %c0_i32_28 = arith.constant 0 : i32
    %33 = arith.cmpi ne, %32, %c0_i32_28 : i32
    scf.if %33 {
      %c0_29 = arith.constant 0 : index
      %c0_30 = arith.constant 0 : index
      %34 = vector.load %arg12[%c0_29, %c0_30] : memref<16x32xf32, #tpu.memory_space<vmem>>, vector<16x32xf32>
      %c0_31 = arith.constant 0 : index
      %c0_32 = arith.constant 0 : index
      %35 = vector.load %arg8[%c0_31, %c0_32] : memref<1x32xf32, #tpu.memory_space<vmem>>, vector<1x32xf32>
      %36 = vector.broadcast %35 : vector<1x32xf32> to vector<16x32xf32>
      %37 = arith.addf %34, %36 : vector<16x32xf32>
      %c0_33 = arith.constant 0 : index
      %c0_34 = arith.constant 0 : index
      %38 = vector.load %arg14[%c0_33, %c0_34] : memref<16x128xf32, #tpu.memory_space<vmem>>, vector<16x128xf32>
      %c0_35 = arith.constant 0 : index
      %c0_36 = arith.constant 0 : index
      %39 = vector.load %arg10[%c0_35, %c0_36] : memref<128x32xf32, #tpu.memory_space<vmem>>, vector<128x32xf32>
      %cst_37 = arith.constant dense<0.000000e+00> : vector<16x32xf32>
      %40 = tpu.matmul %38, %39, %cst_37 {dimension_numbers = #tpu.dot_dimension_numbers<[1], [0], [0], [1], [0, 0, 1, 1], [], []>} : vector<16x128xf32>, vector<128x32xf32>, vector<16x32xf32> -> vector<16x32xf32>
      %41 = arith.addf %37, %40 : vector<16x32xf32>
      %c0_38 = arith.constant 0 : index
      %c0_39 = arith.constant 0 : index
      %42 = vector.load %arg11[%c0_38, %c0_39] : memref<16x32xf32, #tpu.memory_space<vmem>>, vector<16x32xf32>
      tpu.vector_store %arg11[%c0_38, %c0_39], %41 {strides = array<i32>} : memref<16x32xf32, #tpu.memory_space<vmem>>, vector<16x32xf32>,
    } else {
    }
    return
  }
  func.func @transform_0(%arg0: i32, %arg1: i32) -> (i32, i32) {
    %c0_i32 = arith.constant 0 : i32
    %c0_i32_0 = arith.constant 0 : i32
    return %arg0, %c0_i32 : i32, i32
  }
  func.func @transform_1(%arg0: i32, %arg1: i32) -> (i32, i32) {
    %c0_i32 = arith.constant 0 : i32
    %c0_i32_0 = arith.constant 0 : i32
    return %c0_i32, %arg1 : i32, i32
  }
  func.func @transform_2(%arg0: i32, %arg1: i32) -> (i32, i32) {
    %c0_i32 = arith.constant 0 : i32
    %c0_i32_0 = arith.constant 0 : i32
    return %c0_i32, %arg1 : i32, i32
  }
  func.func @transform_3(%arg0: i32, %arg1: i32) -> (i32, i32) {
    %c0_i32 = arith.constant 0 : i32
    %c0_i32_0 = arith.constant 0 : i32
    %c0_i32_1 = arith.constant 0 : i32
    return %c0_i32, %c0_i32_0 : i32, i32
  }
  func.func @transform_4(%arg0: i32, %arg1: i32) -> (i32, i32) {
    %c0_i32 = arith.constant 0 : i32
    %c0_i32_0 = arith.constant 0 : i32
    return %c0_i32, %arg1 : i32, i32
  }
  func.func @transform_5(%arg0: i32, %arg1: i32) -> (i32, i32) {
    %c0_i32 = arith.constant 0 : i32
    %c0_i32_0 = arith.constant 0 : i32
    return %arg1, %c0_i32 : i32, i32
  }
  func.func @transform_6(%arg0: i32, %arg1: i32) -> (i32, i32) {
    %c0_i32 = arith.constant 0 : i32
    %c0_i32_0 = arith.constant 0 : i32
    %c0_i32_1 = arith.constant 0 : i32
    return %c0_i32, %c0_i32_0 : i32, i32
  }
  func.func @transform_7(%arg0: i32, %arg1: i32) -> (i32, i32) {
    %c0_i32 = arith.constant 0 : i32
    %c0_i32_0 = arith.constant 0 : i32
    return %arg1, %c0_i32 : i32, i32
  }
  func.func @transform_8(%arg0: i32, %arg1: i32) -> (i32, i32) {
    %c0_i32 = arith.constant 0 : i32
    %c0_i32_0 = arith.constant 0 : i32
    %c0_i32_1 = arith.constant 0 : i32
    return %c0_i32, %c0_i32_0 : i32, i32
  }
  func.func @transform_9(%arg0: i32, %arg1: i32) -> (i32, i32) {
    %c0_i32 = arith.constant 0 : i32
    %c0_i32_0 = arith.constant 0 : i32
    return %arg0, %c0_i32 : i32, i32
  }
}

</mosaic_0001>

<llo_original>
// kernel: tpu_custom_call.1
$region0: #{tpu_custom_call.1}
  #allocation0 [shape = 'u32[]', space=smem, size = 0x4, offset = 0x4, fixed_abs, tag = 'smem constant byte address 0x4 - core index']
  #allocation1 [shape = 'u32[144,128]{1,0:T(1,128)}', space=vmem, size = 0x12000, scoped, tag = 'internal scratch']
  #allocation2 [shape = 'f32[16,32]{1,0:T(8,128)}', space=vmem, size = 0x2000, scoped, tag = 'scratch operand']
  #allocation3 [shape = 'f32[16,128]{1,0:T(8,128)}', space=vmem, size = 0x2000, scoped, tag = 'scratch operand']
  #allocation4 [shape = 'f32[16,128]{1,0:T(8,128)}', space=vmem, size = 0x2000, scoped, tag = 'scratch operand']
  %s0 = inlined_call_operand.hbm [shape: f32[16,32], index: 0, kind: input, shape index: {}]
  %s1 = inlined_call_operand.vmem [shape: f32[32,128], index: 1, kind: input, shape index: {}]
  %s2 = inlined_call_operand.vmem [shape: f32[1,128], index: 2, kind: input, shape index: {}]
  %s3 = inlined_call_operand.hbm [shape: f32[32,128], index: 3, kind: input, shape index: {}]
  %s4 = inlined_call_operand.vmem [shape: f32[128,128], index: 4, kind: input, shape index: {}]
  %s5 = inlined_call_operand.vmem [shape: f32[128,32], index: 5, kind: input, shape index: {}]
  %s6 = inlined_call_operand.vmem [shape: f32[1,32], index: 6, kind: input, shape index: {}]
  %s7 = inlined_call_operand.vmem [shape: f32[128,128], index: 7, kind: input, shape index: {}]
  %s8 = inlined_call_operand.vmem [shape: f32[128,32], index: 8, kind: input, shape index: {}]
  %s9 = inlined_call_operand.hbm [shape: f32[16,32], index: 9, kind: output, shape index: {}]
  %s10 = sld [smem:[#allocation0]]
  $region62: #{tpu_custom_call.1} parent=0
    _
  %s12 = ssub.s32 1, %s10
  %s13 = scalar_select 0, %s12, %s10
  $region1: #{tpu_custom_call.1} parent=0
    #allocation5 [shape = 'u8[8192]{0}', space=vmem, size = 0x2000, scoped, tag = 'input window, operand 0, single buffered']
    #allocation6 [shape = 's32[1]{0}', space=sflag, size = 0x4, scoped, tag = 'scoped memory for tpu_custom_call.1']
    #allocation7 [shape = 's32[1]{0}', space=sflag, size = 0x4, scoped, tag = 'scoped memory for tpu_custom_call.1']
    #allocation8 [shape = 'u8[16384]{0}', space=vmem, size = 0x4000, scoped, tag = 'input window, operand 3, single buffered']
    #allocation9 [shape = 's32[1]{0}', space=sflag, size = 0x4, scoped, tag = 'scoped memory for tpu_custom_call.1']
    #allocation10 [shape = 'u8[8192]{0}', space=vmem, size = 0x2000, scoped, tag = 'output window, operand 0, single buffered']
    %14 = vsyncpa [#allocation6], 0
    %15 = vsyncpa [#allocation9], 0
    %16 = vsyncpa [#allocation7], 0
    // Predicated region
    $region2: #{tpu_custom_call.1} parent=1 // pred_check
      _
    $region3: #{tpu_custom_call.1} parent=1 // pred_check_branch
      %18 = sbr.rel (0) target = $region5
    $region4: #{tpu_custom_call.1} parent=1 // pred_region
      %s20 = ssub.s32 256, 256
      %21 = vsyncadd [#allocation6], %s20
      %s22 = sshll.u32 [#allocation5], 4
      %s23 = int_to_ptr.vmem [resolvable:$true] %s22
      %28 = dma.hbm_to_vmem [thread:$0]  %s0, 256, %s23, [#allocation6], 128, 128, 8
    $region5: #{tpu_custom_call.1} parent=1 // pred_fallthru
      _
    // Predicated region
    $region6: #{tpu_custom_call.1} parent=1 // pred_check
      _
    $region7: #{tpu_custom_call.1} parent=1 // pred_check_branch
      %30 = sbr.rel (0) target = $region9
    $region8: #{tpu_custom_call.1} parent=1 // pred_region
      _
    $region9: #{tpu_custom_call.1} parent=1 // pred_fallthru
      _
    // Predicated region
    $region10: #{tpu_custom_call.1} parent=1 // pred_check
      _
    $region11: #{tpu_custom_call.1} parent=1 // pred_check_branch
      %32 = sbr.rel (0) target = $region13
    $region12: #{tpu_custom_call.1} parent=1 // pred_region
      _
    $region13: #{tpu_custom_call.1} parent=1 // pred_fallthru
      _
    // Predicated region
    $region14: #{tpu_custom_call.1} parent=1 // pred_check
      _
    $region15: #{tpu_custom_call.1} parent=1 // pred_check_branch
      %34 = sbr.rel (0) target = $region17
    $region16: #{tpu_custom_call.1} parent=1 // pred_region
      %s36 = ssub.s32 512, 512
      %37 = vsyncadd [#allocation9], %s36
      %s38 = sshll.u32 [#allocation8], 4
      %s39 = int_to_ptr.vmem [resolvable:$true] %s38
      %44 = dma.hbm_to_vmem [thread:$0]  %s3, 512, %s39, [#allocation9], 128, 128, 8
    $region17: #{tpu_custom_call.1} parent=1 // pred_fallthru
      _
    // Predicated region
    $region18: #{tpu_custom_call.1} parent=1 // pred_check
      _
    $region19: #{tpu_custom_call.1} parent=1 // pred_check_branch
      %46 = sbr.rel (0) target = $region21
    $region20: #{tpu_custom_call.1} parent=1 // pred_region
      _
    $region21: #{tpu_custom_call.1} parent=1 // pred_fallthru
      _
    // Predicated region
    $region22: #{tpu_custom_call.1} parent=1 // pred_check
      _
    $region23: #{tpu_custom_call.1} parent=1 // pred_check_branch
      %48 = sbr.rel (0) target = $region25
    $region24: #{tpu_custom_call.1} parent=1 // pred_region
      _
    $region25: #{tpu_custom_call.1} parent=1 // pred_fallthru
      _
    // Predicated region
    $region26: #{tpu_custom_call.1} parent=1 // pred_check
      _
    $region27: #{tpu_custom_call.1} parent=1 // pred_check_branch
      %50 = sbr.rel (0) target = $region29
    $region28: #{tpu_custom_call.1} parent=1 // pred_region
      _
    $region29: #{tpu_custom_call.1} parent=1 // pred_fallthru
      _
    // Predicated region
    $region30: #{tpu_custom_call.1} parent=1 // pred_check
      _
    $region31: #{tpu_custom_call.1} parent=1 // pred_check_branch
      %52 = sbr.rel (0) target = $region33
    $region32: #{tpu_custom_call.1} parent=1 // pred_region
      _
    $region33: #{tpu_custom_call.1} parent=1 // pred_fallthru
      _
    // Predicated region
    $region34: #{tpu_custom_call.1} parent=1 // pred_check
      _
    $region35: #{tpu_custom_call.1} parent=1 // pred_check_branch
      %54 = sbr.rel (0) target = $region37
    $region36: #{tpu_custom_call.1} parent=1 // pred_region
      _
    $region37: #{tpu_custom_call.1} parent=1 // pred_fallthru
      _
    // Predicated region
    $region38: #{tpu_custom_call.1} parent=1 // pred_check
      _
    $region39: #{tpu_custom_call.1} parent=1 // pred_check_branch
      %56 = sbr.rel (0) target = $region41
    $region40: #{tpu_custom_call.1} parent=1 // pred_region
      %57 = dma.done [#allocation6], 256
    $region41: #{tpu_custom_call.1} parent=1 // pred_fallthru
      _
    // Predicated region
    $region42: #{tpu_custom_call.1} parent=1 // pred_check
      _
    $region43: #{tpu_custom_call.1} parent=1 // pred_check_branch
      %59 = sbr.rel (0) target = $region45
    $region44: #{tpu_custom_call.1} parent=1 // pred_region
      %60 = dma.done [#allocation9], 512
    $region45: #{tpu_custom_call.1} parent=1 // pred_fallthru
      _
    %v61 = vld [vmem:[#allocation5] sm:$0xff]
    %v62 = vld [vmem:[#allocation5 + $0x8] sm:$0xff]
    %p63 = scmp.eq.s32.totalorder 0, 0
    // Predicated region
    $region46: #{tpu_custom_call.1} parent=1 // pred_check
      %p64 = pneg %p63
    $region47: #{tpu_custom_call.1} parent=1 // pred_check_branch
      %66 = sbr.rel (%p64) target = $region49
    $region48: #{tpu_custom_call.1} parent=1 // pred_region
      %v67 = vld [vmem:[#allocation8] sm:$0xff]
      %v68 = vld [vmem:[#allocation8 + $0x8] sm:$0xff]
      %v69 = vld [vmem:[#allocation8 + $0x10] sm:$0xff]
      %v70 = vld [vmem:[#allocation8 + $0x18] sm:$0xff]
      %vm71 = vcmask 261120
      %v73 = vsel %vm71, %v61, 0
      %v76 = vsel %vm71, %v62, 0
      %78 = vmatprep.subr.mxu0 0.0
      %79 = vmatpush1.msra.mxu0 %v67
      %80 = vmatprep.subr.mxu0 0.0
      %81 = vmatpush1.msra.mxu0 %v68
      %82 = vmatprep.subr.mxu0 0.0
      %83 = vmatpush1.msra.mxu0 %v69
      %84 = vmatprep.subr.mxu0 0.0
      %85 = vmatpush1.msra.mxu0 %v70
      %86 = vmatprep.subr.mxu0 0.0
      %87 = vmatpush1.msra.mxu0 0.0
      %88 = vmatprep.subr.mxu0 0.0
      %89 = vmatpush1.msra.mxu0 0.0
      %90 = vmatprep.subr.mxu0 0.0
      %91 = vmatpush1.msra.mxu0 0.0
      %92 = vmatprep.subr.mxu0 0.0
      %93 = vmatpush1.msra.mxu0 0.0
      %94 = vmatprep.subr.mxu0 0.0
      %95 = vmatpush1.msra.mxu0 0.0
      %96 = vmatprep.subr.mxu0 0.0
      %97 = vmatpush1.msra.mxu0 0.0
      %98 = vmatprep.subr.mxu0 0.0
      %99 = vmatpush1.msra.mxu0 0.0
      %100 = vmatprep.subr.mxu0 0.0
      %101 = vmatpush1.msra.mxu0 0.0
      %102 = vmatprep.subr.mxu0 0.0
      %103 = vmatpush1.msra.mxu0 0.0
      %104 = vmatprep.subr.mxu0 0.0
      %105 = vmatpush1.msra.mxu0 0.0
      %106 = vmatprep.subr.mxu0 0.0
      %107 = vmatpush1.msra.mxu0 0.0
      %108 = vmatprep.subr.mxu0 0.0
      %109 = vmatpush1.msra.mxu0 0.0
      %110 = vmatprep.subr.mxu0 0.0
      %111 = vmatpush1.msra.mxu0 0.0
      %112 = vmatprep.subr.mxu0 0.0
      %113 = vmatpush1.msra.mxu0 0.0
      %114 = vmatprep.subr.mxu0 0.0
      %115 = vmatpush1.msra.mxu0 0.0
      %116 = vmatprep.subr.mxu0 0.0
      %117 = vmatpush1.msra.mxu0 0.0
      %118 = vmatprep.subr.mxu0 0.0
      %119 = vmatpush1.msra.mxu0 0.0
      %120 = vmatprep.subr.mxu0 0.0
      %121 = vmatpush1.msra.mxu0 0.0
      %122 = vmatprep.subr.mxu0 0.0
      %123 = vmatpush1.msra.mxu0 0.0
      %124 = vmatprep.subr.mxu0 0.0
      %125 = vmatpush1.msra.mxu0 0.0
      %126 = vmatprep.subr.mxu0 0.0
      %127 = vmatpush1.msra.mxu0 0.0
      %128 = vmatprep.subr.mxu0 0.0
      %129 = vmatpush1.msra.mxu0 0.0
      %130 = vmatprep.subr.mxu0 0.0
      %131 = vmatpush1.msra.mxu0 0.0
      %132 = vmatprep.subr.mxu0 0.0
      %133 = vmatpush1.msra.mxu0 0.0
      %134 = vmatprep.subr.mxu0 0.0
      %135 = vmatpush1.msra.mxu0 0.0
      %136 = vmatprep.subr.mxu0 0.0
      %137 = vmatpush1.msra.mxu0 0.0
      %138 = vmatprep.subr.mxu0 0.0
      %139 = vmatpush1.msra.mxu0 0.0
      %140 = vmatprep.subr.mxu0 0.0
      %141 = vmatpush1.msra.mxu0 0.0
      %142 = vmatprep.mubr.f32.mxu0 0.0
      %143 = vmatmul.mubr.f32.gmra.mrb[0].mxu0 %v73
      %v144 = vpop.f32.mrb[0].mxu0
      %v145 = vadd.f32 0.0, %v144
      %v146 = vpop.f32.mrb[0].mxu0
      %147 = vmatprep.mubr.f32.mxu0 0.0
      %148 = vmatmul.mubr.f32.gmra.mrb[0].mxu0 %v76
      %v149 = vpop.f32.mrb[0].mxu0
      %v150 = vadd.f32 0.0, %v149
      %v151 = vpop.f32.mrb[0].mxu0
      %152 = vdwg.mxu0
      %153 = vst [vmem:[#allocation3] sm:$0xff] %v145
      %154 = vst [vmem:[#allocation3 + $0x8] sm:$0xff] %v150
      %155 = vst.msk [vmem:[#allocation2] sm:$0xff] %vm71, 0.0
      %156 = vst.msk [vmem:[#allocation2 + $0x8] sm:$0xff] %vm71, 0.0
      %157 = vst [vmem:[#allocation4] sm:$0xff] 0.0
      %158 = vst [vmem:[#allocation4 + $0x8] sm:$0xff] 0.0
    $region49: #{tpu_custom_call.1} parent=1 // pred_fallthru
      _
    %v159 = vld [vmem:[%s1] sm:$0xff]
    %v160 = vld [vmem:[%s1 + $0x8] sm:$0xff]
    %v161 = vld [vmem:[%s1 + $0x10] sm:$0xff]
    %v162 = vld [vmem:[%s1 + $0x18] sm:$0xff]
    %v163 = vld [vmem:[%s2] sm:$0x1]
    %v165 = vlaneseq
    %v166 = vshrl.u32 %v165, 7
    %v167 = vsub.s32 0, %v166
    %v168 = vrot.slane %v163, %v167
    %vm170 = vcmask 261120
    %v172 = vsel %vm170, %v61, 0
    %v175 = vsel %vm170, %v62, 0
    %177 = vmatprep.subr.mxu0 0.0
    %178 = vmatpush1.msra.mxu0 %v159
    %179 = vmatprep.subr.mxu0 0.0
    %180 = vmatpush1.msra.mxu0 %v160
    %181 = vmatprep.subr.mxu0 0.0
    %182 = vmatpush1.msra.mxu0 %v161
    %183 = vmatprep.subr.mxu0 0.0
    %184 = vmatpush1.msra.mxu0 %v162
    %185 = vmatprep.subr.mxu0 0.0
    %186 = vmatpush1.msra.mxu0 0.0
    %187 = vmatprep.subr.mxu0 0.0
    %188 = vmatpush1.msra.mxu0 0.0
    %189 = vmatprep.subr.mxu0 0.0
    %190 = vmatpush1.msra.mxu0 0.0
    %191 = vmatprep.subr.mxu0 0.0
    %192 = vmatpush1.msra.mxu0 0.0
    %193 = vmatprep.subr.mxu0 0.0
    %194 = vmatpush1.msra.mxu0 0.0
    %195 = vmatprep.subr.mxu0 0.0
    %196 = vmatpush1.msra.mxu0 0.0
    %197 = vmatprep.subr.mxu0 0.0
    %198 = vmatpush1.msra.mxu0 0.0
    %199 = vmatprep.subr.mxu0 0.0
    %200 = vmatpush1.msra.mxu0 0.0
    %201 = vmatprep.subr.mxu0 0.0
    %202 = vmatpush1.msra.mxu0 0.0
    %203 = vmatprep.subr.mxu0 0.0
    %204 = vmatpush1.msra.mxu0 0.0
    %205 = vmatprep.subr.mxu0 0.0
    %206 = vmatpush1.msra.mxu0 0.0
    %207 = vmatprep.subr.mxu0 0.0
    %208 = vmatpush1.msra.mxu0 0.0
    %209 = vmatprep.subr.mxu0 0.0
    %210 = vmatpush1.msra.mxu0 0.0
    %211 = vmatprep.subr.mxu0 0.0
    %212 = vmatpush1.msra.mxu0 0.0
    %213 = vmatprep.subr.mxu0 0.0
    %214 = vmatpush1.msra.mxu0 0.0
    %215 = vmatprep.subr.mxu0 0.0
    %216 = vmatpush1.msra.mxu0 0.0
    %217 = vmatprep.subr.mxu0 0.0
    %218 = vmatpush1.msra.mxu0 0.0
    %219 = vmatprep.subr.mxu0 0.0
    %220 = vmatpush1.msra.mxu0 0.0
    %221 = vmatprep.subr.mxu0 0.0
    %222 = vmatpush1.msra.mxu0 0.0
    %223 = vmatprep.subr.mxu0 0.0
    %224 = vmatpush1.msra.mxu0 0.0
    %225 = vmatprep.subr.mxu0 0.0
    %226 = vmatpush1.msra.mxu0 0.0
    %227 = vmatprep.subr.mxu0 0.0
    %228 = vmatpush1.msra.mxu0 0.0
    %229 = vmatprep.subr.mxu0 0.0
    %230 = vmatpush1.msra.mxu0 0.0
    %231 = vmatprep.subr.mxu0 0.0
    %232 = vmatpush1.msra.mxu0 0.0
    %233 = vmatprep.subr.mxu0 0.0
    %234 = vmatpush1.msra.mxu0 0.0
    %235 = vmatprep.subr.mxu0 0.0
    %236 = vmatpush1.msra.mxu0 0.0
    %237 = vmatprep.subr.mxu0 0.0
    %238 = vmatpush1.msra.mxu0 0.0
    %239 = vmatprep.subr.mxu0 0.0
    %240 = vmatpush1.msra.mxu0 0.0
    %241 = vmatprep.mubr.f32.mxu0 0.0
    %242 = vmatmul.mubr.f32.gmra.mrb[0].mxu0 %v172
    %v243 = vpop.f32.mrb[0].mxu0
    %v244 = vadd.f32 %v168, %v243
    %v245 = vpop.f32.mrb[0].mxu0
    %246 = vmatprep.mubr.f32.mxu0 0.0
    %247 = vmatmul.mubr.f32.gmra.mrb[0].mxu0 %v175
    %v248 = vpop.f32.mrb[0].mxu0
    %v249 = vadd.f32 %v168, %v248
    %v250 = vpop.f32.mrb[0].mxu0
    %251 = vdwg.mxu0
    %v252 = vld [vmem:[#allocation3] sm:$0xff]
    %v253 = vld [vmem:[#allocation3 + $0x8] sm:$0xff]
    %v254 = vld [vmem:[%s4] sm:$0xff]
    %v255 = vld [vmem:[%s4 + $0x8] sm:$0xff]
    %v256 = vld [vmem:[%s4 + $0x10] sm:$0xff]
    %v257 = vld [vmem:[%s4 + $0x18] sm:$0xff]
    %v258 = vld [vmem:[%s4 + $0x20] sm:$0xff]
    %v259 = vld [vmem:[%s4 + $0x28] sm:$0xff]
    %v260 = vld [vmem:[%s4 + $0x30] sm:$0xff]
    %v261 = vld [vmem:[%s4 + $0x38] sm:$0xff]
    %v262 = vld [vmem:[%s4 + $0x40] sm:$0xff]
    %v263 = vld [vmem:[%s4 + $0x48] sm:$0xff]
    %v264 = vld [vmem:[%s4 + $0x50] sm:$0xff]
    %v265 = vld [vmem:[%s4 + $0x58] sm:$0xff]
    %v266 = vld [vmem:[%s4 + $0x60] sm:$0xff]
    %v267 = vld [vmem:[%s4 + $0x68] sm:$0xff]
    %v268 = vld [vmem:[%s4 + $0x70] sm:$0xff]
    %v269 = vld [vmem:[%s4 + $0x78] sm:$0xff]
    %270 = vmatprep.subr.mxu0 0.0
    %271 = vmatpush1.msra.mxu0 %v254
    %272 = vmatprep.subr.mxu0 0.0
    %273 = vmatpush1.msra.mxu0 %v255
    %274 = vmatprep.subr.mxu0 0.0
    %275 = vmatpush1.msra.mxu0 %v256
    %276 = vmatprep.subr.mxu0 0.0
    %277 = vmatpush1.msra.mxu0 %v257
    %278 = vmatprep.subr.mxu0 0.0
    %279 = vmatpush1.msra.mxu0 %v258
    %280 = vmatprep.subr.mxu0 0.0
    %281 = vmatpush1.msra.mxu0 %v259
    %282 = vmatprep.subr.mxu0 0.0
    %283 = vmatpush1.msra.mxu0 %v260
    %284 = vmatprep.subr.mxu0 0.0
    %285 = vmatpush1.msra.mxu0 %v261
    %286 = vmatprep.subr.mxu0 0.0
    %287 = vmatpush1.msra.mxu0 %v262
    %288 = vmatprep.subr.mxu0 0.0
    %289 = vmatpush1.msra.mxu0 %v263
    %290 = vmatprep.subr.mxu0 0.0
    %291 = vmatpush1.msra.mxu0 %v264
    %292 = vmatprep.subr.mxu0 0.0
    %293 = vmatpush1.msra.mxu0 %v265
    %294 = vmatprep.subr.mxu0 0.0
    %295 = vmatpush1.msra.mxu0 %v266
    %296 = vmatprep.subr.mxu0 0.0
    %297 = vmatpush1.msra.mxu0 %v267
    %298 = vmatprep.subr.mxu0 0.0
    %299 = vmatpush1.msra.mxu0 %v268
    %300 = vmatprep.subr.mxu0 0.0
    %301 = vmatpush1.msra.mxu0 %v269
    %302 = vmatprep.subr.mxu0 0.0
    %303 = vmatpush1.msra.mxu0 0.0
    %304 = vmatprep.subr.mxu0 0.0
    %305 = vmatpush1.msra.mxu0 0.0
    %306 = vmatprep.subr.mxu0 0.0
    %307 = vmatpush1.msra.mxu0 0.0
    %308 = vmatprep.subr.mxu0 0.0
    %309 = vmatpush1.msra.mxu0 0.0
    %310 = vmatprep.subr.mxu0 0.0
    %311 = vmatpush1.msra.mxu0 0.0
    %312 = vmatprep.subr.mxu0 0.0
    %313 = vmatpush1.msra.mxu0 0.0
    %314 = vmatprep.subr.mxu0 0.0
    %315 = vmatpush1.msra.mxu0 0.0
    %316 = vmatprep.subr.mxu0 0.0
    %317 = vmatpush1.msra.mxu0 0.0
    %318 = vmatprep.subr.mxu0 0.0
    %319 = vmatpush1.msra.mxu0 0.0
    %320 = vmatprep.subr.mxu0 0.0
    %321 = vmatpush1.msra.mxu0 0.0
    %322 = vmatprep.subr.mxu0 0.0
    %323 = vmatpush1.msra.mxu0 0.0
    %324 = vmatprep.subr.mxu0 0.0
    %325 = vmatpush1.msra.mxu0 0.0
    %326 = vmatprep.subr.mxu0 0.0
    %327 = vmatpush1.msra.mxu0 0.0
    %328 = vmatprep.subr.mxu0 0.0
    %329 = vmatpush1.msra.mxu0 0.0
    %330 = vmatprep.subr.mxu0 0.0
    %331 = vmatpush1.msra.mxu0 0.0
    %332 = vmatprep.subr.mxu0 0.0
    %333 = vmatpush1.msra.mxu0 0.0
    %334 = vmatprep.mubr.f32.mxu0 0.0
    %335 = vmatmul.mubr.f32.gmra.mrb[0].mxu0 %v252
    %v336 = vpop.f32.mrb[0].mxu0
    %v337 = vadd.f32 0.0, %v336
    %v338 = vpop.f32.mrb[0].mxu0
    %339 = vmatprep.mubr.f32.mxu0 0.0
    %340 = vmatmul.mubr.f32.gmra.mrb[0].mxu0 %v253
    %v341 = vpop.f32.mrb[0].mxu0
    %v342 = vadd.f32 0.0, %v341
    %v343 = vpop.f32.mrb[0].mxu0
    %344 = vdwg.mxu0
    %v345 = vadd.f32 %v244, %v337
    %v346 = vadd.f32 %v249, %v342
    %v347 = vmul.f32 %v345, 1.702
    %v348 = vmul.f32 %v346, 1.702
    %v349 = vxor.u32 %v347, 2147483648
    %v350 = vxor.u32 %v348, 2147483648
    %v351 = vmul.f32 %v349, 1.442695
    %v352 = vpow.pop %v351
    %v353 = vmul.f32 %v350, 1.442695
    %v354 = vpow.pop %v353
    %v355 = vadd.f32 %v352, 1.0
    %v356 = vadd.f32 %v354, 1.0
    %v357 = vrcp.pop %v355
    %v358 = vmul.f32 1.0, %v357
    %v359 = vrcp.pop %v356
    %v360 = vmul.f32 1.0, %v359
    %v361 = vmul.f32 %v345, %v358
    %v362 = vmul.f32 %v346, %v360
    %v363 = vld [vmem:[#allocation2] sm:$0xff]
    %v364 = vld [vmem:[#allocation2 + $0x8] sm:$0xff]
    %v365 = vld [vmem:[%s5] sm:$0xff]
    %v366 = vld [vmem:[%s5 + $0x8] sm:$0xff]
    %v367 = vld [vmem:[%s5 + $0x10] sm:$0xff]
    %v368 = vld [vmem:[%s5 + $0x18] sm:$0xff]
    %v369 = vld [vmem:[%s5 + $0x20] sm:$0xff]
    %v370 = vld [vmem:[%s5 + $0x28] sm:$0xff]
    %v371 = vld [vmem:[%s5 + $0x30] sm:$0xff]
    %v372 = vld [vmem:[%s5 + $0x38] sm:$0xff]
    %v373 = vld [vmem:[%s5 + $0x40] sm:$0xff]
    %v374 = vld [vmem:[%s5 + $0x48] sm:$0xff]
    %v375 = vld [vmem:[%s5 + $0x50] sm:$0xff]
    %v376 = vld [vmem:[%s5 + $0x58] sm:$0xff]
    %v377 = vld [vmem:[%s5 + $0x60] sm:$0xff]
    %v378 = vld [vmem:[%s5 + $0x68] sm:$0xff]
    %v379 = vld [vmem:[%s5 + $0x70] sm:$0xff]
    %v380 = vld [vmem:[%s5 + $0x78] sm:$0xff]
    %381 = vmatprep.subr.mxu0 0.0
    %382 = vmatpush1.msra.mxu0 %v365
    %383 = vmatprep.subr.mxu0 0.0
    %384 = vmatpush1.msra.mxu0 %v366
    %385 = vmatprep.subr.mxu0 0.0
    %386 = vmatpush1.msra.mxu0 %v367
    %387 = vmatprep.subr.mxu0 0.0
    %388 = vmatpush1.msra.mxu0 %v368
    %389 = vmatprep.subr.mxu0 0.0
    %390 = vmatpush1.msra.mxu0 %v369
    %391 = vmatprep.subr.mxu0 0.0
    %392 = vmatpush1.msra.mxu0 %v370
    %393 = vmatprep.subr.mxu0 0.0
    %394 = vmatpush1.msra.mxu0 %v371
    %395 = vmatprep.subr.mxu0 0.0
    %396 = vmatpush1.msra.mxu0 %v372
    %397 = vmatprep.subr.mxu0 0.0
    %398 = vmatpush1.msra.mxu0 %v373
    %399 = vmatprep.subr.mxu0 0.0
    %400 = vmatpush1.msra.mxu0 %v374
    %401 = vmatprep.subr.mxu0 0.0
    %402 = vmatpush1.msra.mxu0 %v375
    %403 = vmatprep.subr.mxu0 0.0
    %404 = vmatpush1.msra.mxu0 %v376
    %405 = vmatprep.subr.mxu0 0.0
    %406 = vmatpush1.msra.mxu0 %v377
    %407 = vmatprep.subr.mxu0 0.0
    %408 = vmatpush1.msra.mxu0 %v378
    %409 = vmatprep.subr.mxu0 0.0
    %410 = vmatpush1.msra.mxu0 %v379
    %411 = vmatprep.subr.mxu0 0.0
    %412 = vmatpush1.msra.mxu0 %v380
    %413 = vmatprep.subr.mxu0 0.0
    %414 = vmatpush1.msra.mxu0 0.0
    %415 = vmatprep.subr.mxu0 0.0
    %416 = vmatpush1.msra.mxu0 0.0
    %417 = vmatprep.subr.mxu0 0.0
    %418 = vmatpush1.msra.mxu0 0.0
    %419 = vmatprep.subr.mxu0 0.0
    %420 = vmatpush1.msra.mxu0 0.0
    %421 = vmatprep.subr.mxu0 0.0
    %422 = vmatpush1.msra.mxu0 0.0
    %423 = vmatprep.subr.mxu0 0.0
    %424 = vmatpush1.msra.mxu0 0.0
    %425 = vmatprep.subr.mxu0 0.0
    %426 = vmatpush1.msra.mxu0 0.0
    %427 = vmatprep.subr.mxu0 0.0
    %428 = vmatpush1.msra.mxu0 0.0
    %429 = vmatprep.subr.mxu0 0.0
    %430 = vmatpush1.msra.mxu0 0.0
    %431 = vmatprep.subr.mxu0 0.0
    %432 = vmatpush1.msra.mxu0 0.0
    %433 = vmatprep.subr.mxu0 0.0
    %434 = vmatpush1.msra.mxu0 0.0
    %435 = vmatprep.subr.mxu0 0.0
    %436 = vmatpush1.msra.mxu0 0.0
    %437 = vmatprep.subr.mxu0 0.0
    %438 = vmatpush1.msra.mxu0 0.0
    %439 = vmatprep.subr.mxu0 0.0
    %440 = vmatpush1.msra.mxu0 0.0
    %441 = vmatprep.subr.mxu0 0.0
    %442 = vmatpush1.msra.mxu0 0.0
    %443 = vmatprep.subr.mxu0 0.0
    %444 = vmatpush1.msra.mxu0 0.0
    %445 = vmatprep.mubr.f32.mxu0 0.0
    %446 = vmatmul.mubr.f32.gmra.mrb[0].mxu0 %v361
    %v447 = vpop.f32.mrb[0].mxu0
    %v448 = vadd.f32 0.0, %v447
    %v449 = vpop.f32.mrb[0].mxu0
    %450 = vmatprep.mubr.f32.mxu0 0.0
    %451 = vmatmul.mubr.f32.gmra.mrb[0].mxu0 %v362
    %v452 = vpop.f32.mrb[0].mxu0
    %v453 = vadd.f32 0.0, %v452
    %v454 = vpop.f32.mrb[0].mxu0
    %455 = vdwg.mxu0
    %v456 = vadd.f32 %v363, %v448
    %v457 = vadd.f32 %v364, %v453
    %458 = vst.msk [vmem:[#allocation2] sm:$0xff] %vm170, %v456
    %459 = vst.msk [vmem:[#allocation2 + $0x8] sm:$0xff] %vm170, %v457
    %v460 = vld [vmem:[#allocation4] sm:$0xff]
    %v461 = vld [vmem:[#allocation4 + $0x8] sm:$0xff]
    %v462 = vld [vmem:[%s7] sm:$0xff]
    %v463 = vld [vmem:[%s7 + $0x8] sm:$0xff]
    %v464 = vld [vmem:[%s7 + $0x10] sm:$0xff]
    %v465 = vld [vmem:[%s7 + $0x18] sm:$0xff]
    %v466 = vld [vmem:[%s7 + $0x20] sm:$0xff]
    %v467 = vld [vmem:[%s7 + $0x28] sm:$0xff]
    %v468 = vld [vmem:[%s7 + $0x30] sm:$0xff]
    %v469 = vld [vmem:[%s7 + $0x38] sm:$0xff]
    %v470 = vld [vmem:[%s7 + $0x40] sm:$0xff]
    %v471 = vld [vmem:[%s7 + $0x48] sm:$0xff]
    %v472 = vld [vmem:[%s7 + $0x50] sm:$0xff]
    %v473 = vld [vmem:[%s7 + $0x58] sm:$0xff]
    %v474 = vld [vmem:[%s7 + $0x60] sm:$0xff]
    %v475 = vld [vmem:[%s7 + $0x68] sm:$0xff]
    %v476 = vld [vmem:[%s7 + $0x70] sm:$0xff]
    %v477 = vld [vmem:[%s7 + $0x78] sm:$0xff]
    %478 = vmatprep.subr.mxu0 0.0
    %479 = vmatpush1.msra.mxu0 %v462
    %480 = vmatprep.subr.mxu0 0.0
    %481 = vmatpush1.msra.mxu0 %v463
    %482 = vmatprep.subr.mxu0 0.0
    %483 = vmatpush1.msra.mxu0 %v464
    %484 = vmatprep.subr.mxu0 0.0
    %485 = vmatpush1.msra.mxu0 %v465
    %486 = vmatprep.subr.mxu0 0.0
    %487 = vmatpush1.msra.mxu0 %v466
    %488 = vmatprep.subr.mxu0 0.0
    %489 = vmatpush1.msra.mxu0 %v467
    %490 = vmatprep.subr.mxu0 0.0
    %491 = vmatpush1.msra.mxu0 %v468
    %492 = vmatprep.subr.mxu0 0.0
    %493 = vmatpush1.msra.mxu0 %v469
    %494 = vmatprep.subr.mxu0 0.0
    %495 = vmatpush1.msra.mxu0 %v470
    %496 = vmatprep.subr.mxu0 0.0
    %497 = vmatpush1.msra.mxu0 %v471
    %498 = vmatprep.subr.mxu0 0.0
    %499 = vmatpush1.msra.mxu0 %v472
    %500 = vmatprep.subr.mxu0 0.0
    %501 = vmatpush1.msra.mxu0 %v473
    %502 = vmatprep.subr.mxu0 0.0
    %503 = vmatpush1.msra.mxu0 %v474
    %504 = vmatprep.subr.mxu0 0.0
    %505 = vmatpush1.msra.mxu0 %v475
    %506 = vmatprep.subr.mxu0 0.0
    %507 = vmatpush1.msra.mxu0 %v476
    %508 = vmatprep.subr.mxu0 0.0
    %509 = vmatpush1.msra.mxu0 %v477
    %510 = vmatprep.subr.mxu0 0.0
    %511 = vmatpush1.msra.mxu0 0.0
    %512 = vmatprep.subr.mxu0 0.0
    %513 = vmatpush1.msra.mxu0 0.0
    %514 = vmatprep.subr.mxu0 0.0
    %515 = vmatpush1.msra.mxu0 0.0
    %516 = vmatprep.subr.mxu0 0.0
    %517 = vmatpush1.msra.mxu0 0.0
    %518 = vmatprep.subr.mxu0 0.0
    %519 = vmatpush1.msra.mxu0 0.0
    %520 = vmatprep.subr.mxu0 0.0
    %521 = vmatpush1.msra.mxu0 0.0
    %522 = vmatprep.subr.mxu0 0.0
    %523 = vmatpush1.msra.mxu0 0.0
    %524 = vmatprep.subr.mxu0 0.0
    %525 = vmatpush1.msra.mxu0 0.0
    %526 = vmatprep.subr.mxu0 0.0
    %527 = vmatpush1.msra.mxu0 0.0
    %528 = vmatprep.subr.mxu0 0.0
    %529 = vmatpush1.msra.mxu0 0.0
    %530 = vmatprep.subr.mxu0 0.0
    %531 = vmatpush1.msra.mxu0 0.0
    %532 = vmatprep.subr.mxu0 0.0
    %533 = vmatpush1.msra.mxu0 0.0
    %534 = vmatprep.subr.mxu0 0.0
    %535 = vmatpush1.msra.mxu0 0.0
    %536 = vmatprep.subr.mxu0 0.0
    %537 = vmatpush1.msra.mxu0 0.0
    %538 = vmatprep.subr.mxu0 0.0
    %539 = vmatpush1.msra.mxu0 0.0
    %540 = vmatprep.subr.mxu0 0.0
    %541 = vmatpush1.msra.mxu0 0.0
    %542 = vmatprep.mubr.f32.mxu0 0.0
    %543 = vmatmul.mubr.f32.gmra.mrb[0].mxu0 %v361
    %v544 = vpop.f32.mrb[0].mxu0
    %v545 = vadd.f32 0.0, %v544
    %v546 = vpop.f32.mrb[0].mxu0
    %547 = vmatprep.mubr.f32.mxu0 0.0
    %548 = vmatmul.mubr.f32.gmra.mrb[0].mxu0 %v362
    %v549 = vpop.f32.mrb[0].mxu0
    %v550 = vadd.f32 0.0, %v549
    %v551 = vpop.f32.mrb[0].mxu0
    %552 = vdwg.mxu0
    %v553 = vadd.f32 %v460, %v545
    %v554 = vadd.f32 %v461, %v550
    %555 = vst [vmem:[#allocation4] sm:$0xff] %v553
    %556 = vst [vmem:[#allocation4 + $0x8] sm:$0xff] %v554
    // Predicated region
    $region50: #{tpu_custom_call.1} parent=1 // pred_check
      %p557 = pneg %p63
    $region51: #{tpu_custom_call.1} parent=1 // pred_check_branch
      %559 = sbr.rel (%p557) target = $region53
    $region52: #{tpu_custom_call.1} parent=1 // pred_region
      %v560 = vld [vmem:[#allocation2] sm:$0xff]
      %v561 = vld [vmem:[#allocation2 + $0x8] sm:$0xff]
      %v562 = vld [vmem:[%s6] sm:$0x1]
      %v564 = vlaneseq
      %v565 = vshrl.u32 %v564, 7
      %v566 = vsub.s32 0, %v565
      %v567 = vrot.slane %v562, %v566
      %v569 = vadd.f32 %v560, %v567
      %v570 = vadd.f32 %v561, %v567
      %v571 = vld [vmem:[#allocation4] sm:$0xff]
      %v572 = vld [vmem:[#allocation4 + $0x8] sm:$0xff]
      %v573 = vld [vmem:[%s8] sm:$0xff]
      %v574 = vld [vmem:[%s8 + $0x8] sm:$0xff]
      %v575 = vld [vmem:[%s8 + $0x10] sm:$0xff]
      %v576 = vld [vmem:[%s8 + $0x18] sm:$0xff]
      %v577 = vld [vmem:[%s8 + $0x20] sm:$0xff]
      %v578 = vld [vmem:[%s8 + $0x28] sm:$0xff]
      %v579 = vld [vmem:[%s8 + $0x30] sm:$0xff]
      %v580 = vld [vmem:[%s8 + $0x38] sm:$0xff]
      %v581 = vld [vmem:[%s8 + $0x40] sm:$0xff]
      %v582 = vld [vmem:[%s8 + $0x48] sm:$0xff]
      %v583 = vld [vmem:[%s8 + $0x50] sm:$0xff]
      %v584 = vld [vmem:[%s8 + $0x58] sm:$0xff]
      %v585 = vld [vmem:[%s8 + $0x60] sm:$0xff]
      %v586 = vld [vmem:[%s8 + $0x68] sm:$0xff]
      %v587 = vld [vmem:[%s8 + $0x70] sm:$0xff]
      %v588 = vld [vmem:[%s8 + $0x78] sm:$0xff]
      %589 = vmatprep.subr.mxu0 0.0
      %590 = vmatpush1.msra.mxu0 %v573
      %591 = vmatprep.subr.mxu0 0.0
      %592 = vmatpush1.msra.mxu0 %v574
      %593 = vmatprep.subr.mxu0 0.0
      %594 = vmatpush1.msra.mxu0 %v575
      %595 = vmatprep.subr.mxu0 0.0
      %596 = vmatpush1.msra.mxu0 %v576
      %597 = vmatprep.subr.mxu0 0.0
      %598 = vmatpush1.msra.mxu0 %v577
      %599 = vmatprep.subr.mxu0 0.0
      %600 = vmatpush1.msra.mxu0 %v578
      %601 = vmatprep.subr.mxu0 0.0
      %602 = vmatpush1.msra.mxu0 %v579
      %603 = vmatprep.subr.mxu0 0.0
      %604 = vmatpush1.msra.mxu0 %v580
      %605 = vmatprep.subr.mxu0 0.0
      %606 = vmatpush1.msra.mxu0 %v581
      %607 = vmatprep.subr.mxu0 0.0
      %608 = vmatpush1.msra.mxu0 %v582
      %609 = vmatprep.subr.mxu0 0.0
      %610 = vmatpush1.msra.mxu0 %v583
      %611 = vmatprep.subr.mxu0 0.0
      %612 = vmatpush1.msra.mxu0 %v584
      %613 = vmatprep.subr.mxu0 0.0
      %614 = vmatpush1.msra.mxu0 %v585
      %615 = vmatprep.subr.mxu0 0.0
      %616 = vmatpush1.msra.mxu0 %v586
      %617 = vmatprep.subr.mxu0 0.0
      %618 = vmatpush1.msra.mxu0 %v587
      %619 = vmatprep.subr.mxu0 0.0
      %620 = vmatpush1.msra.mxu0 %v588
      %621 = vmatprep.subr.mxu0 0.0
      %622 = vmatpush1.msra.mxu0 0.0
      %623 = vmatprep.subr.mxu0 0.0
      %624 = vmatpush1.msra.mxu0 0.0
      %625 = vmatprep.subr.mxu0 0.0
      %626 = vmatpush1.msra.mxu0 0.0
      %627 = vmatprep.subr.mxu0 0.0
      %628 = vmatpush1.msra.mxu0 0.0
      %629 = vmatprep.subr.mxu0 0.0
      %630 = vmatpush1.msra.mxu0 0.0
      %631 = vmatprep.subr.mxu0 0.0
      %632 = vmatpush1.msra.mxu0 0.0
      %633 = vmatprep.subr.mxu0 0.0
      %634 = vmatpush1.msra.mxu0 0.0
      %635 = vmatprep.subr.mxu0 0.0
      %636 = vmatpush1.msra.mxu0 0.0
      %637 = vmatprep.subr.mxu0 0.0
      %638 = vmatpush1.msra.mxu0 0.0
      %639 = vmatprep.subr.mxu0 0.0
      %640 = vmatpush1.msra.mxu0 0.0
      %641 = vmatprep.subr.mxu0 0.0
      %642 = vmatpush1.msra.mxu0 0.0
      %643 = vmatprep.subr.mxu0 0.0
      %644 = vmatpush1.msra.mxu0 0.0
      %645 = vmatprep.subr.mxu0 0.0
      %646 = vmatpush1.msra.mxu0 0.0
      %647 = vmatprep.subr.mxu0 0.0
      %648 = vmatpush1.msra.mxu0 0.0
      %649 = vmatprep.subr.mxu0 0.0
      %650 = vmatpush1.msra.mxu0 0.0
      %651 = vmatprep.subr.mxu0 0.0
      %652 = vmatpush1.msra.mxu0 0.0
      %653 = vmatprep.mubr.f32.mxu0 0.0
      %654 = vmatmul.mubr.f32.gmra.mrb[0].mxu0 %v571
      %v655 = vpop.f32.mrb[0].mxu0
      %v656 = vadd.f32 0.0, %v655
      %v657 = vpop.f32.mrb[0].mxu0
      %658 = vmatprep.mubr.f32.mxu0 0.0
      %659 = vmatmul.mubr.f32.gmra.mrb[0].mxu0 %v572
      %v660 = vpop.f32.mrb[0].mxu0
      %v661 = vadd.f32 0.0, %v660
      %v662 = vpop.f32.mrb[0].mxu0
      %663 = vdwg.mxu0
      %v664 = vadd.f32 %v569, %v656
      %v665 = vadd.f32 %v570, %v661
      %666 = vst.msk [vmem:[#allocation10] sm:$0xff] %vm170, %v664
      %667 = vst.msk [vmem:[#allocation10 + $0x8] sm:$0xff] %vm170, %v665
    $region53: #{tpu_custom_call.1} parent=1 // pred_fallthru
      _
    // Predicated region
    $region54: #{tpu_custom_call.1} parent=1 // pred_check
      _
    $region55: #{tpu_custom_call.1} parent=1 // pred_check_branch
      %669 = sbr.rel (0) target = $region57
    $region56: #{tpu_custom_call.1} parent=1 // pred_region
      %s671 = ssub.s32 256, 256
      %672 = vsyncadd [#allocation7], %s671
      %s673 = sshll.u32 [#allocation10], 4
      %s674 = int_to_ptr.vmem [resolvable:$true] %s673
      %679 = dma.vmem_to_hbm [thread:$0]  %s674, 256, %s9, [#allocation7], 128, 128, 8
    $region57: #{tpu_custom_call.1} parent=1 // pred_fallthru
      _
    // Predicated region
    $region58: #{tpu_custom_call.1} parent=1 // pred_check
      _
    $region59: #{tpu_custom_call.1} parent=1 // pred_check_branch
      %681 = sbr.rel (0) target = $region61
    $region60: #{tpu_custom_call.1} parent=1 // pred_region
      %682 = dma.done [#allocation7], 256
    $region61: #{tpu_custom_call.1} parent=1 // pred_fallthru
      _
    %683 = vsyncpa [#allocation6], 1
    %684 = vsyncpa [#allocation9], 1
    %685 = vsyncpa [#allocation7], 1

</llo_original>
